<compile_context>
chip_gen: v7x
topology: tpu7x:2x2x1
jax: 0.10.0
libtpu: 0.0.40
codegen_flags: <defaults>
</compile_context>

<pallas_src>
import functools

import jax
import jax.numpy as jnp
from jax import lax
from jax.experimental import pallas as pl
from jax.experimental.pallas import tpu as pltpu

K = 7     # conv taps
PAD = 3   # zero padding on each side of the convolved axis


def _shift_flat(x, s):
    """result[:, p] = x[:, p + s] if 0 <= p + s < n else 0 (s is a static Python int)."""
    if s == 0:
        return x
    c, n = x.shape
    z = jnp.zeros((c, abs(s)), x.dtype)
    if s > 0:
        return jnp.concatenate([x[:, s:], z], axis=1)
    return jnp.concatenate([z, x[:, : n + s]], axis=1)


def _line_block_kernel(x_ref, w_ref, bh_ref, bv_ref, o_ref, *, N, H, W):
    # x_ref:  (N, C, H*W) f32   NCHW with (H, W) flattened (free reshape in wrapper)
    # w_ref:  (2C, 2*K*C) bf16  block-diagonal fused weights (h-conv | v-conv)
    # bh_ref: (C, 1) f32, bv_ref: (C, 1) f32
    # o_ref:  (N, C, H*W) f32
    HW = H * W
    C = x_ref.shape[1]

    # In-kernel lane -> w index; hoist the 6 W-boundary masks once (shared across
    # batch elements and reused for every tap).
    widx = lax.broadcasted_iota(jnp.int32, (1, HW), 1) % W
    w_valid = {}
    for k in range(K):
        d = k - PAD
        if d != 0:
            w_valid[d] = jnp.logical_and(widx + d >= 0, widx + d < W)

    # Build the per-batch im2col slab (2*K*C, HW) in bf16, then lane-concatenate the
    # batch elements.  Building per batch keeps the H-direction zero padding correct
    # (no bleed across the frame boundary between the two images).
    slabs = []
    for n in range(N):                       # static loop, N=2
        xc = x_ref[n].astype(jnp.bfloat16)   # (C, HW) bf16: all tap traffic in bf16
        rows = []
        for k in range(K):                   # (7,1) conv taps: whole-row shifts;
            d = k - PAD                      # zero fill == the 3-row zero padding
            rows.append(_shift_flat(xc, d * W))
        for k in range(K):                   # (1,7) conv taps: lane shifts + col mask
            d = k - PAD
            if d == 0:
                rows.append(xc)
            else:
                rows.append(jnp.where(w_valid[d], _shift_flat(xc, d), 0.0))
        slabs.append(jnp.concatenate(rows, axis=0))        # (2*K*C, HW)
    slab = jnp.concatenate(slabs, axis=1)                   # (2*K*C, N*HW) = (112, 512)

    # One fused block-diagonal MXU matmul for both directions and both batch elements,
    # f32 accumulation, lane-dense (2C, N*HW) result.
    acc = jnp.dot(w_ref[...], slab, preferred_element_type=jnp.float32)  # (2C, N*HW)
    acc_h = acc[:C]
    acc_v = acc[C:]

    out = jnp.maximum(acc_h + bh_ref[...], acc_v + bv_ref[...])   # (C, N*HW) f32 epilogue
    for n in range(N):                                            # 256-lane aligned stores
        o_ref[n] = out[:, n * HW:(n + 1) * HW].astype(o_ref.dtype)


def line_block(x_nchw, wh, wv, bh, bv):
    """LineBlock forward.
    x_nchw: (N, C, H, W) f32.
    wh: (C, C, 7, 1) OIHW weights of conv_h.  wv: (C, C, 1, 7) OIHW weights of conv_v.
    bh, bv: (C,) biases."""
    N, C, H, W = x_nchw.shape
    HW = H * W

    # Stay in NCHW; flattening the contiguous (H, W) dims is free (no transpose pass).
    x3 = x_nchw.reshape(N, C, HW)

    # Fused per-direction weight matrices: row = c_out, column = k*C + c_in.
    whf = jnp.transpose(wh[:, :, :, 0], (0, 2, 1)).reshape(C, K * C)
    wvf = jnp.transpose(wv[:, :, 0, :], (0, 2, 1)).reshape(C, K * C)
    # Block-diagonal fused weight (2C, 2*K*C): rows 0..C-1 -> h-conv, rows C..2C-1 -> v-conv.
    zero = jnp.zeros((C, K * C), whf.dtype)
    wfull = jnp.concatenate(
        [jnp.concatenate([whf, zero], axis=1),
         jnp.concatenate([zero, wvf], axis=1)],
        axis=0,
    ).astype(jnp.bfloat16)
    bh2 = bh.reshape(C, 1).astype(jnp.float32)
    bv2 = bv.reshape(C, 1).astype(jnp.float32)

    kernel = functools.partial(_line_block_kernel, N=N, H=H, W=W)
    out3 = pl.pallas_call(
        kernel,
        out_shape=jax.ShapeDtypeStruct((N, C, HW), x_nchw.dtype),
        grid_spec=pltpu.PrefetchScalarGridSpec(
            num_scalar_prefetch=0,
            grid=(1,),                        # single step: both batch elements at once
            in_specs=[
                pl.BlockSpec((N, C, HW), lambda i: (0, 0, 0)),
                pl.BlockSpec((2 * C, 2 * K * C), lambda i: (0, 0)),
                pl.BlockSpec((C, 1), lambda i: (0, 0)),
                pl.BlockSpec((C, 1), lambda i: (0, 0)),
            ],
            out_specs=pl.BlockSpec((N, C, HW), lambda i: (0, 0, 0)),
        ),
        compiler_params=pltpu.CompilerParams(dimension_semantics=("arbitrary",)),
    )(x3, wfull, bh2, bv2)
    return out3.reshape(N, C, H, W)


def _reference(x_nchw, wh, wv, bh, bv):
    # PyTorch-equivalent reference (f32) using lax.conv in NCHW / OIHW.
    dn = lax.conv_dimension_numbers(x_nchw.shape, wh.shape, ('NCHW', 'OIHW', 'NCHW'))
    y_h = lax.conv_general_dilated(x_nchw, wh, (1, 1), ((PAD, PAD), (0, 0)),
                                   dimension_numbers=dn)
    y_v = lax.conv_general_dilated(x_nchw, wv, (1, 1), ((0, 0), (PAD, PAD)),
                                   dimension_numbers=dn)
    bh4 = bh.reshape(1, -1, 1, 1)
    bv4 = bv.reshape(1, -1, 1, 1)
    return jnp.maximum(y_h + bh4, y_v + bv4)


if __name__ == "__main__":
    N, C, H, W = 2, 8, 16, 16   # planes = 8
    key = jax.random.PRNGKey(0)
    kx, kwh, kwv, kbh, kbv = jax.random.split(key, 5)
    x = jax.random.normal(kx, (N, C, H, W), dtype=jnp.float32)
    # Parameters in PyTorch Conv2d layout: (out_ch, in_ch, kh, kw) and (out_ch,) bias.
    wh = jax.random.normal(kwh, (C, C, K, 1), dtype=jnp.float32) * 0.1
    wv = jax.random.normal(kwv, (C, C, 1, K), dtype=jnp.float32) * 0.1
    bh = jax.random.normal(kbh, (C,), dtype=jnp.float32) * 0.1
    bv = jax.random.normal(kbv, (C,), dtype=jnp.float32) * 0.1

    out = line_block(x, wh, wv, bh, bv)
    jax.block_until_ready(out)

    ref = _reference(x, wh, wv, bh, bv)
    assert out.shape == (N, C, H, W)
    # Tolerance loosened vs a pure-f32 path because the matmul operands are bf16
    # (f32 accumulation); formulation errors would be O(1), far above this.
    assert jnp.allclose(out, ref, atol=5e-2, rtol=5e-2)
    print("KERNEL_OK")
</pallas_src>

<mosaic_0001>
module attributes {stable_mosaic.version = 11 : i64} {
  func.func @_line_block_kernel(%arg0: i32, %arg1: memref<2x8x256xf32, #tpu.memory_space<vmem>>, %arg2: memref<16x112xbf16, #tpu.memory_space<vmem>>, %arg3: memref<8x1xf32, #tpu.memory_space<vmem>>, %arg4: memref<8x1xf32, #tpu.memory_space<vmem>>, %arg5: memref<2x8x256xf32, #tpu.memory_space<vmem>>) attributes {dimension_semantics = [#tpu.dimension_semantics<arbitrary>], iteration_bounds = array<i64: 1>, scalar_prefetch = 0 : i64, scratch_operands = 0 : i64, tpu.core_type = #tpu.core_type<tc>, window_params = [{pipeline_mode = #tpu.pipeline_mode<synchronous>, transform_indices = @transform_0, window_bounds = array<i64: 2, 8, 256>}, {pipeline_mode = #tpu.pipeline_mode<synchronous>, transform_indices = @transform_1, window_bounds = array<i64: 16, 112>}, {pipeline_mode = #tpu.pipeline_mode<synchronous>, transform_indices = @transform_2, window_bounds = array<i64: 8, 1>}, {pipeline_mode = #tpu.pipeline_mode<synchronous>, transform_indices = @transform_3, window_bounds = array<i64: 8, 1>}, {pipeline_mode = #tpu.pipeline_mode<synchronous>, transform_indices = @transform_4, window_bounds = array<i64: 2, 8, 256>}]} {
    %0 = tpu.iota {dimensions = array<i32: 1>} : vector<1x256xi32>
    %c16_i32 = arith.constant 16 : i32
    %c0_i32 = arith.constant 0 : i32
    %1 = arith.cmpi eq, %c16_i32, %c0_i32 : i32
    %c1_i32 = arith.constant 1 : i32
    %2 = arith.select %1, %c1_i32, %c16_i32 : i32
    %3 = vector.broadcast %2 : i32 to vector<1x256xi32>
    %4 = arith.remsi %0, %3 : vector<1x256xi32>
    %c0_i32_0 = arith.constant 0 : i32
    %5 = vector.broadcast %c0_i32_0 : i32 to vector<1x256xi32>
    %6 = arith.cmpi ne, %4, %5 : vector<1x256xi32>
    %c0_i32_1 = arith.constant 0 : i32
    %7 = vector.broadcast %c0_i32_1 : i32 to vector<1x256xi32>
    %8 = arith.cmpi slt, %4, %7 : vector<1x256xi32>
    %c0_i32_2 = arith.constant 0 : i32
    %9 = arith.cmpi slt, %2, %c0_i32_2 : i32
    %10 = vector.broadcast %9 : i1 to vector<1x256xi1>
    %11 = vector.broadcast %10 : vector<1x256xi1> to vector<1x256xi1>
    %12 = arith.xori %8, %11 : vector<1x256xi1>
    %13 = arith.andi %12, %6 : vector<1x256xi1>
    %14 = vector.broadcast %2 : i32 to vector<1x256xi32>
    %15 = arith.addi %4, %14 : vector<1x256xi32>
    %16 = arith.select %13, %15, %4 : vector<1x256xi1>, vector<1x256xi32>
    %c-3_i32 = arith.constant -3 : i32
    %17 = vector.broadcast %c-3_i32 : i32 to vector<1x256xi32>
    %18 = arith.addi %16, %17 : vector<1x256xi32>
    %c0_i32_3 = arith.constant 0 : i32
    %19 = vector.broadcast %c0_i32_3 : i32 to vector<1x256xi32>
    %20 = arith.cmpi sge, %18, %19 : vector<1x256xi32>
    %c-3_i32_4 = arith.constant -3 : i32
    %21 = vector.broadcast %c-3_i32_4 : i32 to vector<1x256xi32>
    %22 = arith.addi %16, %21 : vector<1x256xi32>
    %c16_i32_5 = arith.constant 16 : i32
    %23 = vector.broadcast %c16_i32_5 : i32 to vector<1x256xi32>
    %24 = arith.cmpi slt, %22, %23 : vector<1x256xi32>
    %25 = arith.andi %20, %24 : vector<1x256xi1>
    %c-2_i32 = arith.constant -2 : i32
    %26 = vector.broadcast %c-2_i32 : i32 to vector<1x256xi32>
    %27 = arith.addi %16, %26 : vector<1x256xi32>
    %c0_i32_6 = arith.constant 0 : i32
    %28 = vector.broadcast %c0_i32_6 : i32 to vector<1x256xi32>
    %29 = arith.cmpi sge, %27, %28 : vector<1x256xi32>
    %c-2_i32_7 = arith.constant -2 : i32
    %30 = vector.broadcast %c-2_i32_7 : i32 to vector<1x256xi32>
    %31 = arith.addi %16, %30 : vector<1x256xi32>
    %c16_i32_8 = arith.constant 16 : i32
    %32 = vector.broadcast %c16_i32_8 : i32 to vector<1x256xi32>
    %33 = arith.cmpi slt, %31, %32 : vector<1x256xi32>
    %34 = arith.andi %29, %33 : vector<1x256xi1>
    %c-1_i32 = arith.constant -1 : i32
    %35 = vector.broadcast %c-1_i32 : i32 to vector<1x256xi32>
    %36 = arith.addi %16, %35 : vector<1x256xi32>
    %c0_i32_9 = arith.constant 0 : i32
    %37 = vector.broadcast %c0_i32_9 : i32 to vector<1x256xi32>
    %38 = arith.cmpi sge, %36, %37 : vector<1x256xi32>
    %c-1_i32_10 = arith.constant -1 : i32
    %39 = vector.broadcast %c-1_i32_10 : i32 to vector<1x256xi32>
    %40 = arith.addi %16, %39 : vector<1x256xi32>
    %c16_i32_11 = arith.constant 16 : i32
    %41 = vector.broadcast %c16_i32_11 : i32 to vector<1x256xi32>
    %42 = arith.cmpi slt, %40, %41 : vector<1x256xi32>
    %43 = arith.andi %38, %42 : vector<1x256xi1>
    %c1_i32_12 = arith.constant 1 : i32
    %44 = vector.broadcast %c1_i32_12 : i32 to vector<1x256xi32>
    %45 = arith.addi %16, %44 : vector<1x256xi32>
    %c0_i32_13 = arith.constant 0 : i32
    %46 = vector.broadcast %c0_i32_13 : i32 to vector<1x256xi32>
    %47 = arith.cmpi sge, %45, %46 : vector<1x256xi32>
    %c1_i32_14 = arith.constant 1 : i32
    %48 = vector.broadcast %c1_i32_14 : i32 to vector<1x256xi32>
    %49 = arith.addi %16, %48 : vector<1x256xi32>
    %c16_i32_15 = arith.constant 16 : i32
    %50 = vector.broadcast %c16_i32_15 : i32 to vector<1x256xi32>
    %51 = arith.cmpi slt, %49, %50 : vector<1x256xi32>
    %52 = arith.andi %47, %51 : vector<1x256xi1>
    %c2_i32 = arith.constant 2 : i32
    %53 = vector.broadcast %c2_i32 : i32 to vector<1x256xi32>
    %54 = arith.addi %16, %53 : vector<1x256xi32>
    %c0_i32_16 = arith.constant 0 : i32
    %55 = vector.broadcast %c0_i32_16 : i32 to vector<1x256xi32>
    %56 = arith.cmpi sge, %54, %55 : vector<1x256xi32>
    %c2_i32_17 = arith.constant 2 : i32
    %57 = vector.broadcast %c2_i32_17 : i32 to vector<1x256xi32>
    %58 = arith.addi %16, %57 : vector<1x256xi32>
    %c16_i32_18 = arith.constant 16 : i32
    %59 = vector.broadcast %c16_i32_18 : i32 to vector<1x256xi32>
    %60 = arith.cmpi slt, %58, %59 : vector<1x256xi32>
    %61 = arith.andi %56, %60 : vector<1x256xi1>
    %c3_i32 = arith.constant 3 : i32
    %62 = vector.broadcast %c3_i32 : i32 to vector<1x256xi32>
    %63 = arith.addi %16, %62 : vector<1x256xi32>
    %c0_i32_19 = arith.constant 0 : i32
    %64 = vector.broadcast %c0_i32_19 : i32 to vector<1x256xi32>
    %65 = arith.cmpi sge, %63, %64 : vector<1x256xi32>
    %c3_i32_20 = arith.constant 3 : i32
    %66 = vector.broadcast %c3_i32_20 : i32 to vector<1x256xi32>
    %67 = arith.addi %16, %66 : vector<1x256xi32>
    %c16_i32_21 = arith.constant 16 : i32
    %68 = vector.broadcast %c16_i32_21 : i32 to vector<1x256xi32>
    %69 = arith.cmpi slt, %67, %68 : vector<1x256xi32>
    %70 = arith.andi %65, %69 : vector<1x256xi1>
    %c0 = arith.constant 0 : index
    %c0_22 = arith.constant 0 : index
    %c0_23 = arith.constant 0 : index
    %71 = vector.load %arg1[%c0, %c0_22, %c0_23] : memref<2x8x256xf32, #tpu.memory_space<vmem>>, vector<1x8x256xf32>
    %72 = vector.shape_cast %71 : vector<1x8x256xf32> to vector<8x256xf32>
    %73 = arith.truncf %72 : vector<8x256xf32> to vector<8x256xbf16>
    %cst = arith.constant 0.000000e+00 : bf16
    %74 = vector.broadcast %cst : bf16 to vector<8x48xbf16>
    %75 = vector.extract_strided_slice %73 {offsets = [0, 0], sizes = [8, 208], strides = [1, 1]} : vector<8x256xbf16> to vector<8x208xbf16>
    %76 = tpu.concatenate %74, %75 in 1 : vector<8x48xbf16>, vector<8x208xbf16> -> vector<8x256xbf16>
    %cst_24 = arith.constant 0.000000e+00 : bf16
    %77 = vector.broadcast %cst_24 : bf16 to vector<8x32xbf16>
    %78 = vector.extract_strided_slice %73 {offsets = [0, 0], sizes = [8, 224], strides = [1, 1]} : vector<8x256xbf16> to vector<8x224xbf16>
    %79 = tpu.concatenate %77, %78 in 1 : vector<8x32xbf16>, vector<8x224xbf16> -> vector<8x256xbf16>
    %cst_25 = arith.constant 0.000000e+00 : bf16
    %80 = vector.broadcast %cst_25 : bf16 to vector<8x16xbf16>
    %81 = vector.extract_strided_slice %73 {offsets = [0, 0], sizes = [8, 240], strides = [1, 1]} : vector<8x256xbf16> to vector<8x240xbf16>
    %82 = tpu.concatenate %80, %81 in 1 : vector<8x16xbf16>, vector<8x240xbf16> -> vector<8x256xbf16>
    %cst_26 = arith.constant 0.000000e+00 : bf16
    %83 = vector.broadcast %cst_26 : bf16 to vector<8x16xbf16>
    %84 = vector.extract_strided_slice %73 {offsets = [0, 16], sizes = [8, 240], strides = [1, 1]} : vector<8x256xbf16> to vector<8x240xbf16>
    %85 = tpu.concatenate %84, %83 in 1 : vector<8x240xbf16>, vector<8x16xbf16> -> vector<8x256xbf16>
    %cst_27 = arith.constant 0.000000e+00 : bf16
    %86 = vector.broadcast %cst_27 : bf16 to vector<8x32xbf16>
    %87 = vector.extract_strided_slice %73 {offsets = [0, 32], sizes = [8, 224], strides = [1, 1]} : vector<8x256xbf16> to vector<8x224xbf16>
    %88 = tpu.concatenate %87, %86 in 1 : vector<8x224xbf16>, vector<8x32xbf16> -> vector<8x256xbf16>
    %cst_28 = arith.constant 0.000000e+00 : bf16
    %89 = vector.broadcast %cst_28 : bf16 to vector<8x48xbf16>
    %90 = vector.extract_strided_slice %73 {offsets = [0, 48], sizes = [8, 208], strides = [1, 1]} : vector<8x256xbf16> to vector<8x208xbf16>
    %91 = tpu.concatenate %90, %89 in 1 : vector<8x208xbf16>, vector<8x48xbf16> -> vector<8x256xbf16>
    %cst_29 = arith.constant 0.000000e+00 : bf16
    %92 = vector.broadcast %cst_29 : bf16 to vector<8x3xbf16>
    %93 = vector.extract_strided_slice %73 {offsets = [0, 0], sizes = [8, 253], strides = [1, 1]} : vector<8x256xbf16> to vector<8x253xbf16>
    %94 = tpu.concatenate %92, %93 in 1 : vector<8x3xbf16>, vector<8x253xbf16> -> vector<8x256xbf16>
    %cst_30 = arith.constant 0.000000e+00 : f32
    %95 = arith.truncf %cst_30 : f32 to bf16
    %96 = vector.shape_cast %25 : vector<1x256xi1> to vector<1x256xi1>
    %97 = vector.broadcast %96 : vector<1x256xi1> to vector<8x256xi1>
    %98 = vector.broadcast %95 : bf16 to vector<8x256xbf16>
    %99 = arith.select %97, %94, %98 : vector<8x256xi1>, vector<8x256xbf16>
    %cst_31 = arith.constant 0.000000e+00 : bf16
    %100 = vector.broadcast %cst_31 : bf16 to vector<8x2xbf16>
    %101 = vector.extract_strided_slice %73 {offsets = [0, 0], sizes = [8, 254], strides = [1, 1]} : vector<8x256xbf16> to vector<8x254xbf16>
    %102 = tpu.concatenate %100, %101 in 1 : vector<8x2xbf16>, vector<8x254xbf16> -> vector<8x256xbf16>
    %cst_32 = arith.constant 0.000000e+00 : f32
    %103 = arith.truncf %cst_32 : f32 to bf16
    %104 = vector.shape_cast %34 : vector<1x256xi1> to vector<1x256xi1>
    %105 = vector.broadcast %104 : vector<1x256xi1> to vector<8x256xi1>
    %106 = vector.broadcast %103 : bf16 to vector<8x256xbf16>
    %107 = arith.select %105, %102, %106 : vector<8x256xi1>, vector<8x256xbf16>
    %cst_33 = arith.constant 0.000000e+00 : bf16
    %108 = vector.broadcast %cst_33 : bf16 to vector<8x1xbf16>
    %109 = vector.extract_strided_slice %73 {offsets = [0, 0], sizes = [8, 255], strides = [1, 1]} : vector<8x256xbf16> to vector<8x255xbf16>
    %110 = tpu.concatenate %108, %109 in 1 : vector<8x1xbf16>, vector<8x255xbf16> -> vector<8x256xbf16>
    %cst_34 = arith.constant 0.000000e+00 : f32
    %111 = arith.truncf %cst_34 : f32 to bf16
    %112 = vector.shape_cast %43 : vector<1x256xi1> to vector<1x256xi1>
    %113 = vector.broadcast %112 : vector<1x256xi1> to vector<8x256xi1>
    %114 = vector.broadcast %111 : bf16 to vector<8x256xbf16>
    %115 = arith.select %113, %110, %114 : vector<8x256xi1>, vector<8x256xbf16>
    %cst_35 = arith.constant 0.000000e+00 : bf16
    %116 = vector.broadcast %cst_35 : bf16 to vector<8x1xbf16>
    %117 = vector.extract_strided_slice %73 {offsets = [0, 1], sizes = [8, 255], strides = [1, 1]} : vector<8x256xbf16> to vector<8x255xbf16>
    %118 = tpu.concatenate %117, %116 in 1 : vector<8x255xbf16>, vector<8x1xbf16> -> vector<8x256xbf16>
    %cst_36 = arith.constant 0.000000e+00 : f32
    %119 = arith.truncf %cst_36 : f32 to bf16
    %120 = vector.shape_cast %52 : vector<1x256xi1> to vector<1x256xi1>
    %121 = vector.broadcast %120 : vector<1x256xi1> to vector<8x256xi1>
    %122 = vector.broadcast %119 : bf16 to vector<8x256xbf16>
    %123 = arith.select %121, %118, %122 : vector<8x256xi1>, vector<8x256xbf16>
    %cst_37 = arith.constant 0.000000e+00 : bf16
    %124 = vector.broadcast %cst_37 : bf16 to vector<8x2xbf16>
    %125 = vector.extract_strided_slice %73 {offsets = [0, 2], sizes = [8, 254], strides = [1, 1]} : vector<8x256xbf16> to vector<8x254xbf16>
    %126 = tpu.concatenate %125, %124 in 1 : vector<8x254xbf16>, vector<8x2xbf16> -> vector<8x256xbf16>
    %cst_38 = arith.constant 0.000000e+00 : f32
    %127 = arith.truncf %cst_38 : f32 to bf16
    %128 = vector.shape_cast %61 : vector<1x256xi1> to vector<1x256xi1>
    %129 = vector.broadcast %128 : vector<1x256xi1> to vector<8x256xi1>
    %130 = vector.broadcast %127 : bf16 to vector<8x256xbf16>
    %131 = arith.select %129, %126, %130 : vector<8x256xi1>, vector<8x256xbf16>
    %cst_39 = arith.constant 0.000000e+00 : bf16
    %132 = vector.broadcast %cst_39 : bf16 to vector<8x3xbf16>
    %133 = vector.extract_strided_slice %73 {offsets = [0, 3], sizes = [8, 253], strides = [1, 1]} : vector<8x256xbf16> to vector<8x253xbf16>
    %134 = tpu.concatenate %133, %132 in 1 : vector<8x253xbf16>, vector<8x3xbf16> -> vector<8x256xbf16>
    %cst_40 = arith.constant 0.000000e+00 : f32
    %135 = arith.truncf %cst_40 : f32 to bf16
    %136 = vector.shape_cast %70 : vector<1x256xi1> to vector<1x256xi1>
    %137 = vector.broadcast %136 : vector<1x256xi1> to vector<8x256xi1>
    %138 = vector.broadcast %135 : bf16 to vector<8x256xbf16>
    %139 = arith.select %137, %134, %138 : vector<8x256xi1>, vector<8x256xbf16>
    %140 = tpu.concatenate %76, %79, %82, %73, %85, %88, %91, %99, %107, %115, %73, %123, %131, %139 in 0 : vector<8x256xbf16>, vector<8x256xbf16>, vector<8x256xbf16>, vector<8x256xbf16>, vector<8x256xbf16>, vector<8x256xbf16>, vector<8x256xbf16>, vector<8x256xbf16>, vector<8x256xbf16>, vector<8x256xbf16>, vector<8x256xbf16>, vector<8x256xbf16>, vector<8x256xbf16>, vector<8x256xbf16> -> vector<112x256xbf16>
    %c1 = arith.constant 1 : index
    %c0_41 = arith.constant 0 : index
    %c0_42 = arith.constant 0 : index
    %141 = vector.load %arg1[%c1, %c0_41, %c0_42] : memref<2x8x256xf32, #tpu.memory_space<vmem>>, vector<1x8x256xf32>
    %142 = vector.shape_cast %141 : vector<1x8x256xf32> to vector<8x256xf32>
    %143 = arith.truncf %142 : vector<8x256xf32> to vector<8x256xbf16>
    %cst_43 = arith.constant 0.000000e+00 : bf16
    %144 = vector.broadcast %cst_43 : bf16 to vector<8x48xbf16>
    %145 = vector.extract_strided_slice %143 {offsets = [0, 0], sizes = [8, 208], strides = [1, 1]} : vector<8x256xbf16> to vector<8x208xbf16>
    %146 = tpu.concatenate %144, %145 in 1 : vector<8x48xbf16>, vector<8x208xbf16> -> vector<8x256xbf16>
    %cst_44 = arith.constant 0.000000e+00 : bf16
    %147 = vector.broadcast %cst_44 : bf16 to vector<8x32xbf16>
    %148 = vector.extract_strided_slice %143 {offsets = [0, 0], sizes = [8, 224], strides = [1, 1]} : vector<8x256xbf16> to vector<8x224xbf16>
    %149 = tpu.concatenate %147, %148 in 1 : vector<8x32xbf16>, vector<8x224xbf16> -> vector<8x256xbf16>
    %cst_45 = arith.constant 0.000000e+00 : bf16
    %150 = vector.broadcast %cst_45 : bf16 to vector<8x16xbf16>
    %151 = vector.extract_strided_slice %143 {offsets = [0, 0], sizes = [8, 240], strides = [1, 1]} : vector<8x256xbf16> to vector<8x240xbf16>
    %152 = tpu.concatenate %150, %151 in 1 : vector<8x16xbf16>, vector<8x240xbf16> -> vector<8x256xbf16>
    %cst_46 = arith.constant 0.000000e+00 : bf16
    %153 = vector.broadcast %cst_46 : bf16 to vector<8x16xbf16>
    %154 = vector.extract_strided_slice %143 {offsets = [0, 16], sizes = [8, 240], strides = [1, 1]} : vector<8x256xbf16> to vector<8x240xbf16>
    %155 = tpu.concatenate %154, %153 in 1 : vector<8x240xbf16>, vector<8x16xbf16> -> vector<8x256xbf16>
    %cst_47 = arith.constant 0.000000e+00 : bf16
    %156 = vector.broadcast %cst_47 : bf16 to vector<8x32xbf16>
    %157 = vector.extract_strided_slice %143 {offsets = [0, 32], sizes = [8, 224], strides = [1, 1]} : vector<8x256xbf16> to vector<8x224xbf16>
    %158 = tpu.concatenate %157, %156 in 1 : vector<8x224xbf16>, vector<8x32xbf16> -> vector<8x256xbf16>
    %cst_48 = arith.constant 0.000000e+00 : bf16
    %159 = vector.broadcast %cst_48 : bf16 to vector<8x48xbf16>
    %160 = vector.extract_strided_slice %143 {offsets = [0, 48], sizes = [8, 208], strides = [1, 1]} : vector<8x256xbf16> to vector<8x208xbf16>
    %161 = tpu.concatenate %160, %159 in 1 : vector<8x208xbf16>, vector<8x48xbf16> -> vector<8x256xbf16>
    %cst_49 = arith.constant 0.000000e+00 : bf16
    %162 = vector.broadcast %cst_49 : bf16 to vector<8x3xbf16>
    %163 = vector.extract_strided_slice %143 {offsets = [0, 0], sizes = [8, 253], strides = [1, 1]} : vector<8x256xbf16> to vector<8x253xbf16>
    %164 = tpu.concatenate %162, %163 in 1 : vector<8x3xbf16>, vector<8x253xbf16> -> vector<8x256xbf16>
    %cst_50 = arith.constant 0.000000e+00 : f32
    %165 = arith.truncf %cst_50 : f32 to bf16
    %166 = vector.shape_cast %25 : vector<1x256xi1> to vector<1x256xi1>
    %167 = vector.broadcast %166 : vector<1x256xi1> to vector<8x256xi1>
    %168 = vector.broadcast %165 : bf16 to vector<8x256xbf16>
    %169 = arith.select %167, %164, %168 : vector<8x256xi1>, vector<8x256xbf16>
    %cst_51 = arith.constant 0.000000e+00 : bf16
    %170 = vector.broadcast %cst_51 : bf16 to vector<8x2xbf16>
    %171 = vector.extract_strided_slice %143 {offsets = [0, 0], sizes = [8, 254], strides = [1, 1]} : vector<8x256xbf16> to vector<8x254xbf16>
    %172 = tpu.concatenate %170, %171 in 1 : vector<8x2xbf16>, vector<8x254xbf16> -> vector<8x256xbf16>
    %cst_52 = arith.constant 0.000000e+00 : f32
    %173 = arith.truncf %cst_52 : f32 to bf16
    %174 = vector.shape_cast %34 : vector<1x256xi1> to vector<1x256xi1>
    %175 = vector.broadcast %174 : vector<1x256xi1> to vector<8x256xi1>
    %176 = vector.broadcast %173 : bf16 to vector<8x256xbf16>
    %177 = arith.select %175, %172, %176 : vector<8x256xi1>, vector<8x256xbf16>
    %cst_53 = arith.constant 0.000000e+00 : bf16
    %178 = vector.broadcast %cst_53 : bf16 to vector<8x1xbf16>
    %179 = vector.extract_strided_slice %143 {offsets = [0, 0], sizes = [8, 255], strides = [1, 1]} : vector<8x256xbf16> to vector<8x255xbf16>
    %180 = tpu.concatenate %178, %179 in 1 : vector<8x1xbf16>, vector<8x255xbf16> -> vector<8x256xbf16>
    %cst_54 = arith.constant 0.000000e+00 : f32
    %181 = arith.truncf %cst_54 : f32 to bf16
    %182 = vector.shape_cast %43 : vector<1x256xi1> to vector<1x256xi1>
    %183 = vector.broadcast %182 : vector<1x256xi1> to vector<8x256xi1>
    %184 = vector.broadcast %181 : bf16 to vector<8x256xbf16>
    %185 = arith.select %183, %180, %184 : vector<8x256xi1>, vector<8x256xbf16>
    %cst_55 = arith.constant 0.000000e+00 : bf16
    %186 = vector.broadcast %cst_55 : bf16 to vector<8x1xbf16>
    %187 = vector.extract_strided_slice %143 {offsets = [0, 1], sizes = [8, 255], strides = [1, 1]} : vector<8x256xbf16> to vector<8x255xbf16>
    %188 = tpu.concatenate %187, %186 in 1 : vector<8x255xbf16>, vector<8x1xbf16> -> vector<8x256xbf16>
    %cst_56 = arith.constant 0.000000e+00 : f32
    %189 = arith.truncf %cst_56 : f32 to bf16
    %190 = vector.shape_cast %52 : vector<1x256xi1> to vector<1x256xi1>
    %191 = vector.broadcast %190 : vector<1x256xi1> to vector<8x256xi1>
    %192 = vector.broadcast %189 : bf16 to vector<8x256xbf16>
    %193 = arith.select %191, %188, %192 : vector<8x256xi1>, vector<8x256xbf16>
    %cst_57 = arith.constant 0.000000e+00 : bf16
    %194 = vector.broadcast %cst_57 : bf16 to vector<8x2xbf16>
    %195 = vector.extract_strided_slice %143 {offsets = [0, 2], sizes = [8, 254], strides = [1, 1]} : vector<8x256xbf16> to vector<8x254xbf16>
    %196 = tpu.concatenate %195, %194 in 1 : vector<8x254xbf16>, vector<8x2xbf16> -> vector<8x256xbf16>
    %cst_58 = arith.constant 0.000000e+00 : f32
    %197 = arith.truncf %cst_58 : f32 to bf16
    %198 = vector.shape_cast %61 : vector<1x256xi1> to vector<1x256xi1>
    %199 = vector.broadcast %198 : vector<1x256xi1> to vector<8x256xi1>
    %200 = vector.broadcast %197 : bf16 to vector<8x256xbf16>
    %201 = arith.select %199, %196, %200 : vector<8x256xi1>, vector<8x256xbf16>
    %cst_59 = arith.constant 0.000000e+00 : bf16
    %202 = vector.broadcast %cst_59 : bf16 to vector<8x3xbf16>
    %203 = vector.extract_strided_slice %143 {offsets = [0, 3], sizes = [8, 253], strides = [1, 1]} : vector<8x256xbf16> to vector<8x253xbf16>
    %204 = tpu.concatenate %203, %202 in 1 : vector<8x253xbf16>, vector<8x3xbf16> -> vector<8x256xbf16>
    %cst_60 = arith.constant 0.000000e+00 : f32
    %205 = arith.truncf %cst_60 : f32 to bf16
    %206 = vector.shape_cast %70 : vector<1x256xi1> to vector<1x256xi1>
    %207 = vector.broadcast %206 : vector<1x256xi1> to vector<8x256xi1>
    %208 = vector.broadcast %205 : bf16 to vector<8x256xbf16>
    %209 = arith.select %207, %204, %208 : vector<8x256xi1>, vector<8x256xbf16>
    %210 = tpu.concatenate %146, %149, %152, %143, %155, %158, %161, %169, %177, %185, %143, %193, %201, %209 in 0 : vector<8x256xbf16>, vector<8x256xbf16>, vector<8x256xbf16>, vector<8x256xbf16>, vector<8x256xbf16>, vector<8x256xbf16>, vector<8x256xbf16>, vector<8x256xbf16>, vector<8x256xbf16>, vector<8x256xbf16>, vector<8x256xbf16>, vector<8x256xbf16>, vector<8x256xbf16>, vector<8x256xbf16> -> vector<112x256xbf16>
    %211 = tpu.concatenate %140, %210 in 1 : vector<112x256xbf16>, vector<112x256xbf16> -> vector<112x512xbf16>
    %c0_61 = arith.constant 0 : index
    %c0_62 = arith.constant 0 : index
    %212 = vector.load %arg2[%c0_61, %c0_62] : memref<16x112xbf16, #tpu.memory_space<vmem>>, vector<16x112xbf16>
    %cst_63 = arith.constant dense<0.000000e+00> : vector<16x512xf32>
    %213 = tpu.matmul %212, %211, %cst_63 {dimension_numbers = #tpu.dot_dimension_numbers<[1], [0], [0], [1], [0, 0, 1, 1], [], []>} : vector<16x112xbf16>, vector<112x512xbf16>, vector<16x512xf32> -> vector<16x512xf32>
    %214 = vector.extract_strided_slice %213 {offsets = [0, 0], sizes = [8, 512], strides = [1, 1]} : vector<16x512xf32> to vector<8x512xf32>
    %215 = vector.extract_strided_slice %213 {offsets = [8, 0], sizes = [8, 512], strides = [1, 1]} : vector<16x512xf32> to vector<8x512xf32>
    %c0_64 = arith.constant 0 : index
    %c0_65 = arith.constant 0 : index
    %216 = vector.load %arg3[%c0_64, %c0_65] : memref<8x1xf32, #tpu.memory_space<vmem>>, vector<8x1xf32>
    %217 = vector.broadcast %216 : vector<8x1xf32> to vector<8x512xf32>
    %218 = arith.addf %214, %217 : vector<8x512xf32>
    %c0_66 = arith.constant 0 : index
    %c0_67 = arith.constant 0 : index
    %219 = vector.load %arg4[%c0_66, %c0_67] : memref<8x1xf32, #tpu.memory_space<vmem>>, vector<8x1xf32>
    %220 = vector.broadcast %219 : vector<8x1xf32> to vector<8x512xf32>
    %221 = arith.addf %215, %220 : vector<8x512xf32>
    %222 = arith.maximumf %218, %221 : vector<8x512xf32>
    %223 = vector.extract_strided_slice %222 {offsets = [0, 0], sizes = [8, 256], strides = [1, 1]} : vector<8x512xf32> to vector<8x256xf32>
    %c0_68 = arith.constant 0 : index
    %c0_69 = arith.constant 0 : index
    %c0_70 = arith.constant 0 : index
    %224 = vector.load %arg5[%c0_68, %c0_69, %c0_70] : memref<2x8x256xf32, #tpu.memory_space<vmem>>, vector<1x8x256xf32>
    %225 = vector.shape_cast %224 : vector<1x8x256xf32> to vector<8x256xf32>
    %226 = vector.shape_cast %223 : vector<8x256xf32> to vector<1x8x256xf32>
    tpu.vector_store %arg5[%c0_68, %c0_69, %c0_70], %226 {strides = array<i32>} : memref<2x8x256xf32, #tpu.memory_space<vmem>>, vector<1x8x256xf32>,
    %227 = vector.extract_strided_slice %222 {offsets = [0, 256], sizes = [8, 256], strides = [1, 1]} : vector<8x512xf32> to vector<8x256xf32>
    %c1_71 = arith.constant 1 : index
    %c0_72 = arith.constant 0 : index
    %c0_73 = arith.constant 0 : index
    %228 = vector.load %arg5[%c1_71, %c0_72, %c0_73] : memref<2x8x256xf32, #tpu.memory_space<vmem>>, vector<1x8x256xf32>
    %229 = vector.shape_cast %228 : vector<1x8x256xf32> to vector<8x256xf32>
    %230 = vector.shape_cast %227 : vector<8x256xf32> to vector<1x8x256xf32>
    tpu.vector_store %arg5[%c1_71, %c0_72, %c0_73], %230 {strides = array<i32>} : memref<2x8x256xf32, #tpu.memory_space<vmem>>, vector<1x8x256xf32>,
    return
  }
  func.func @transform_0(%arg0: i32) -> (i32, i32, i32) {
    %c0_i32 = arith.constant 0 : i32
    %c0_i32_0 = arith.constant 0 : i32
    %c0_i32_1 = arith.constant 0 : i32
    %c0_i32_2 = arith.constant 0 : i32
    return %c0_i32, %c0_i32_0, %c0_i32_1 : i32, i32, i32
  }
  func.func @transform_1(%arg0: i32) -> (i32, i32) {
    %c0_i32 = arith.constant 0 : i32
    %c0_i32_0 = arith.constant 0 : i32
    %c0_i32_1 = arith.constant 0 : i32
    return %c0_i32, %c0_i32_0 : i32, i32
  }
  func.func @transform_2(%arg0: i32) -> (i32, i32) {
    %c0_i32 = arith.constant 0 : i32
    %c0_i32_0 = arith.constant 0 : i32
    %c0_i32_1 = arith.constant 0 : i32
    return %c0_i32, %c0_i32_0 : i32, i32
  }
  func.func @transform_3(%arg0: i32) -> (i32, i32) {
    %c0_i32 = arith.constant 0 : i32
    %c0_i32_0 = arith.constant 0 : i32
    %c0_i32_1 = arith.constant 0 : i32
    return %c0_i32, %c0_i32_0 : i32, i32
  }
  func.func @transform_4(%arg0: i32) -> (i32, i32, i32) {
    %c0_i32 = arith.constant 0 : i32
    %c0_i32_0 = arith.constant 0 : i32
    %c0_i32_1 = arith.constant 0 : i32
    %c0_i32_2 = arith.constant 0 : i32
    return %c0_i32, %c0_i32_0, %c0_i32_1 : i32, i32, i32
  }
}

</mosaic_0001>

<llo_original>
// kernel: tpu_custom_call.1
$region0: #{tpu_custom_call.1}
  #allocation0 [shape = 'u32[]', space=smem, size = 0x4, offset = 0x4, fixed_abs, tag = 'smem constant byte address 0x4 - core index']
  #allocation1 [shape = 'u32[144,128]{1,0:T(1,128)}', space=vmem, size = 0x12000, scoped, tag = 'internal scratch']
  %s0 = inlined_call_operand.hbm [shape: f32[2,8,256], index: 0, kind: input, shape index: {}]
  %s1 = inlined_call_operand.vmem [shape: bf16[16,112], index: 1, kind: input, shape index: {}]
  %s2 = inlined_call_operand.vmem [shape: f32[8,1], index: 2, kind: input, shape index: {}]
  %s3 = inlined_call_operand.vmem [shape: f32[8,1], index: 3, kind: input, shape index: {}]
  %s4 = inlined_call_operand.hbm [shape: f32[2,8,256], index: 4, kind: output, shape index: {}]
  %s5 = sld [smem:[#allocation0]]
  $region30: #{tpu_custom_call.1} parent=0
    _
  %s7 = ssub.s32 1, %s5
  %s8 = scalar_select 0, %s7, %s5
  $region1: #{tpu_custom_call.1} parent=0
    #allocation2 [shape = 'u8[16384]{0}', space=vmem, size = 0x4000, scoped, tag = 'input window, operand 0, single buffered']
    #allocation3 [shape = 's32[1]{0}', space=sflag, size = 0x4, scoped, tag = 'scoped memory for tpu_custom_call.1']
    #allocation4 [shape = 's32[1]{0}', space=sflag, size = 0x4, scoped, tag = 'scoped memory for tpu_custom_call.1']
    #allocation5 [shape = 'u8[16384]{0}', space=vmem, size = 0x4000, scoped, tag = 'output window, operand 0, single buffered']
    %9 = vsyncpa [#allocation3], 0
    %10 = vsyncpa [#allocation4], 0
    // Predicated region
    $region2: #{tpu_custom_call.1} parent=1 // pred_check
      _
    $region3: #{tpu_custom_call.1} parent=1 // pred_check_branch
      %12 = sbr.rel (0) target = $region5
    $region4: #{tpu_custom_call.1} parent=1 // pred_region
      %s14 = ssub.s32 512, 512
      %15 = vsyncadd [#allocation3], %s14
      %s16 = sshll.u32 [#allocation2], 4
      %s17 = int_to_ptr.vmem [resolvable:$true] %s16
      %22 = dma.hbm_to_vmem [thread:$0]  %s0, 512, %s17, [#allocation3], 256, 256, 16
    $region5: #{tpu_custom_call.1} parent=1 // pred_fallthru
      _
    // Predicated region
    $region6: #{tpu_custom_call.1} parent=1 // pred_check
      _
    $region7: #{tpu_custom_call.1} parent=1 // pred_check_branch
      %24 = sbr.rel (0) target = $region9
    $region8: #{tpu_custom_call.1} parent=1 // pred_region
      _
    $region9: #{tpu_custom_call.1} parent=1 // pred_fallthru
      _
    // Predicated region
    $region10: #{tpu_custom_call.1} parent=1 // pred_check
      _
    $region11: #{tpu_custom_call.1} parent=1 // pred_check_branch
      %26 = sbr.rel (0) target = $region13
    $region12: #{tpu_custom_call.1} parent=1 // pred_region
      _
    $region13: #{tpu_custom_call.1} parent=1 // pred_fallthru
      _
    // Predicated region
    $region14: #{tpu_custom_call.1} parent=1 // pred_check
      _
    $region15: #{tpu_custom_call.1} parent=1 // pred_check_branch
      %28 = sbr.rel (0) target = $region17
    $region16: #{tpu_custom_call.1} parent=1 // pred_region
      _
    $region17: #{tpu_custom_call.1} parent=1 // pred_fallthru
      _
    // Predicated region
    $region18: #{tpu_custom_call.1} parent=1 // pred_check
      _
    $region19: #{tpu_custom_call.1} parent=1 // pred_check_branch
      %30 = sbr.rel (0) target = $region21
    $region20: #{tpu_custom_call.1} parent=1 // pred_region
      %31 = dma.done [#allocation3], 512
    $region21: #{tpu_custom_call.1} parent=1 // pred_fallthru
      _
    %v35 = vlaneseq
    %v36 = vand.u32 %v35, 127
    %v37 = vadd.s32 %v36, 128
    %vm38 = vcmp.lt.s32.totalorder %v36, 0
    %v39 = vsub.s32 0, %v36
    %v40 = vsel %vm38, %v39, %v36
    %v41 = vshrl.u32 %v40, 4
    %v42 = vand.u32 %v40, 15
    %v43 = vsub.s32 0, %v42
    %v44 = vsel %vm38, %v43, %v42
    %vm45 = vcmp.lt.s32.totalorder %v37, 0
    %v46 = vsub.s32 0, %v37
    %v47 = vsel %vm45, %v46, %v37
    %v48 = vshrl.u32 %v47, 4
    %v49 = vand.u32 %v47, 15
    %v50 = vsub.s32 0, %v49
    %v51 = vsel %vm45, %v50, %v49
    %vm52 = vcmp.ne.s32.totalorder %v44, 0
    %vm53 = vcmp.ne.s32.totalorder %v51, 0
    %vm54 = vcmp.lt.s32.totalorder %v44, 0
    %vm55 = vcmp.lt.s32.totalorder %v51, 0
    %vm56 = vmand %vm54, %vm52
    %vm57 = vmand %vm55, %vm53
    %v58 = vadd.s32 %v44, 16
    %v59 = vadd.s32 %v51, 16
    %v60 = vsel %vm56, %v58, %v44
    %v61 = vsel %vm57, %v59, %v51
    %v62 = vadd.s32 %v60, 4294967293
    %v63 = vadd.s32 %v61, 4294967293
    %vm64 = vcmp.ge.s32.totalorder %v62, 0
    %vm65 = vcmp.ge.s32.totalorder %v63, 0
    %vm66 = vcmp.lt.s32.totalorder %v62, 16
    %vm67 = vcmp.lt.s32.totalorder %v63, 16
    %vm68 = vmand %vm64, %vm66
    %vm69 = vmand %vm65, %vm67
    %v70 = vadd.s32 %v60, 4294967294
    %v71 = vadd.s32 %v61, 4294967294
    %vm72 = vcmp.ge.s32.totalorder %v70, 0
    %vm73 = vcmp.ge.s32.totalorder %v71, 0
    %vm74 = vcmp.lt.s32.totalorder %v70, 16
    %vm75 = vcmp.lt.s32.totalorder %v71, 16
    %vm76 = vmand %vm72, %vm74
    %vm77 = vmand %vm73, %vm75
    %v78 = vadd.s32 %v60, 4294967295
    %v79 = vadd.s32 %v61, 4294967295
    %vm80 = vcmp.ge.s32.totalorder %v78, 0
    %vm81 = vcmp.ge.s32.totalorder %v79, 0
    %vm82 = vcmp.lt.s32.totalorder %v78, 16
    %vm83 = vcmp.lt.s32.totalorder %v79, 16
    %vm84 = vmand %vm80, %vm82
    %vm85 = vmand %vm81, %vm83
    %v86 = vadd.s32 %v60, 1
    %v87 = vadd.s32 %v61, 1
    %vm88 = vcmp.ge.s32.totalorder %v86, 0
    %vm89 = vcmp.ge.s32.totalorder %v87, 0
    %vm90 = vcmp.lt.s32.totalorder %v86, 16
    %vm91 = vcmp.lt.s32.totalorder %v87, 16
    %vm92 = vmand %vm88, %vm90
    %vm93 = vmand %vm89, %vm91
    %v94 = vadd.s32 %v60, 2
    %v95 = vadd.s32 %v61, 2
    %vm96 = vcmp.ge.s32.totalorder %v94, 0
    %vm97 = vcmp.ge.s32.totalorder %v95, 0
    %vm98 = vcmp.lt.s32.totalorder %v94, 16
    %vm99 = vcmp.lt.s32.totalorder %v95, 16
    %vm100 = vmand %vm96, %vm98
    %vm101 = vmand %vm97, %vm99
    %v102 = vadd.s32 %v60, 3
    %v103 = vadd.s32 %v61, 3
    %vm104 = vcmp.ge.s32.totalorder %v102, 0
    %vm105 = vcmp.ge.s32.totalorder %v103, 0
    %vm106 = vcmp.lt.s32.totalorder %v102, 16
    %vm107 = vcmp.lt.s32.totalorder %v103, 16
    %vm108 = vmand %vm104, %vm106
    %vm109 = vmand %vm105, %vm107
    %v110 = vld [vmem:[#allocation2] sm:$0xff]
    %v111 = vld [vmem:[#allocation2 + $0x8] sm:$0xff]
    %v112 = vpack.c.bf16 %v110, %v110
    %v113 = vpack.c.bf16 %v111, %v111
    %116 = vrot.lane.b32.xlu0 %v112, 48
    %v117 = vpop.permute.xlu0 %116
    %118 = vrot.lane.b32.xlu0 %v113, 48
    %v119 = vpop.permute.xlu0 %118
    %vm120 = vcmask 392192
    %v121 = vsel %vm120, %v117, %v119
    %vm122 = vcmask 392192
    %v125 = vsel %vm122, 0, %v117
    %126 = vrot.lane.b32.xlu0 %v112, 32
    %v127 = vpop.permute.xlu0 %126
    %128 = vrot.lane.b32.xlu0 %v113, 32
    %v129 = vpop.permute.xlu0 %128
    %vm130 = vcmask 261120
    %v131 = vsel %vm130, %v127, %v129
    %vm132 = vcmask 261120
    %v134 = vsel %vm132, 0, %v127
    %135 = vrot.lane.b32.xlu0 %v112, 16
    %v136 = vpop.permute.xlu0 %135
    %137 = vrot.lane.b32.xlu0 %v113, 16
    %v138 = vpop.permute.xlu0 %137
    %vm139 = vcmask 130048
    %v140 = vsel %vm139, %v136, %v138
    %vm141 = vcmask 130048
    %v143 = vsel %vm141, 0, %v136
    %144 = vrot.lane.b32.xlu0 %v112, 112
    %v145 = vpop.permute.xlu0 %144
    %146 = vrot.lane.b32.xlu0 %v113, 112
    %v147 = vpop.permute.xlu0 %146
    %vm148 = vcmask 916480
    %v149 = vsel %vm148, %v145, %v147
    %vm150 = vcmask 916480
    %v152 = vsel %vm150, %v147, 0
    %153 = vrot.lane.b32.xlu0 %v112, 96
    %v154 = vpop.permute.xlu0 %153
    %155 = vrot.lane.b32.xlu0 %v113, 96
    %v156 = vpop.permute.xlu0 %155
    %vm157 = vcmask 785408
    %v158 = vsel %vm157, %v154, %v156
    %vm159 = vcmask 785408
    %v161 = vsel %vm159, %v156, 0
    %162 = vrot.lane.b32.xlu0 %v112, 80
    %v163 = vpop.permute.xlu0 %162
    %164 = vrot.lane.b32.xlu0 %v113, 80
    %v165 = vpop.permute.xlu0 %164
    %vm166 = vcmask 654336
    %v167 = vsel %vm166, %v163, %v165
    %vm168 = vcmask 654336
    %v170 = vsel %vm168, %v165, 0
    %171 = vrot.lane.b32.xlu0 %v112, 3
    %v172 = vpop.permute.xlu0 %171
    %173 = vrot.lane.b32.xlu0 %v113, 3
    %v174 = vpop.permute.xlu0 %173
    %vm175 = vcmask 23552
    %v176 = vsel %vm175, %v172, %v174
    %vm178 = vcmask 23552
    %v180 = vsel %vm178, 0, %v172
    %v182 = vsel %vm68, 1, 0
    %v183 = vsel %vm69, 1, 0
    %vm184 = vcmp.eq.s32.totalorder %v182, 1
    %vm185 = vcmp.eq.s32.totalorder %v183, 1
    %vm186 = vmpackc.low %vm185, %vm184
    %v187 = vsel %vm186, 65537, 0
    %v188 = vlaneseq
    %v189 = vshrl.u32 %v188, 7
    %v190 = vsub.s32 0, %v189
    %v191 = vrot.slane %v187, %v190
    %v192 = vlaneseq
    %v193 = vshrl.u32 %v192, 7
    %v194 = vsub.s32 4, %v193
    %v195 = vrot.slane %v187, %v194
    %vm196 = vcmp.ne.s16.totalorder %v191, 0
    %vm197 = vcmp.ne.s16.totalorder %v195, 0
    %v198 = vsel %vm196, %v180, 0
    %v199 = vsel %vm197, %v176, 0
    %200 = vrot.lane.b32.xlu0 %v112, 2
    %v201 = vpop.permute.xlu0 %200
    %202 = vrot.lane.b32.xlu0 %v113, 2
    %v203 = vpop.permute.xlu0 %202
    %vm204 = vcmask 15360
    %v205 = vsel %vm204, %v201, %v203
    %vm207 = vcmask 15360
    %v209 = vsel %vm207, 0, %v201
    %v211 = vsel %vm76, 1, 0
    %v212 = vsel %vm77, 1, 0
    %vm213 = vcmp.eq.s32.totalorder %v211, 1
    %vm214 = vcmp.eq.s32.totalorder %v212, 1
    %vm215 = vmpackc.low %vm214, %vm213
    %v216 = vsel %vm215, 65537, 0
    %v217 = vlaneseq
    %v218 = vshrl.u32 %v217, 7
    %v219 = vsub.s32 0, %v218
    %v220 = vrot.slane %v216, %v219
    %v221 = vlaneseq
    %v222 = vshrl.u32 %v221, 7
    %v223 = vsub.s32 4, %v222
    %v224 = vrot.slane %v216, %v223
    %vm225 = vcmp.ne.s16.totalorder %v220, 0
    %vm226 = vcmp.ne.s16.totalorder %v224, 0
    %v227 = vsel %vm225, %v209, 0
    %v228 = vsel %vm226, %v205, 0
    %229 = vrot.lane.b32.xlu0 %v112, 1
    %v230 = vpop.permute.xlu0 %229
    %231 = vrot.lane.b32.xlu0 %v113, 1
    %v232 = vpop.permute.xlu0 %231
    %vm233 = vcmask 7168
    %v234 = vsel %vm233, %v230, %v232
    %vm236 = vcmask 7168
    %v238 = vsel %vm236, 0, %v230
    %v240 = vsel %vm84, 1, 0
    %v241 = vsel %vm85, 1, 0
    %vm242 = vcmp.eq.s32.totalorder %v240, 1
    %vm243 = vcmp.eq.s32.totalorder %v241, 1
    %vm244 = vmpackc.low %vm243, %vm242
    %v245 = vsel %vm244, 65537, 0
    %v246 = vlaneseq
    %v247 = vshrl.u32 %v246, 7
    %v248 = vsub.s32 0, %v247
    %v249 = vrot.slane %v245, %v248
    %v250 = vlaneseq
    %v251 = vshrl.u32 %v250, 7
    %v252 = vsub.s32 4, %v251
    %v253 = vrot.slane %v245, %v252
    %vm254 = vcmp.ne.s16.totalorder %v249, 0
    %vm255 = vcmp.ne.s16.totalorder %v253, 0
    %v256 = vsel %vm254, %v238, 0
    %v257 = vsel %vm255, %v234, 0
    %258 = vrot.lane.b32.xlu0 %v112, 127
    %v259 = vpop.permute.xlu0 %258
    %260 = vrot.lane.b32.xlu0 %v113, 127
    %v261 = vpop.permute.xlu0 %260
    %vm262 = vcmask 1039360
    %v263 = vsel %vm262, %v259, %v261
    %vm265 = vcmask 1039360
    %v267 = vsel %vm265, %v261, 0
    %v269 = vsel %vm92, 1, 0
    %v270 = vsel %vm93, 1, 0
    %vm271 = vcmp.eq.s32.totalorder %v269, 1
    %vm272 = vcmp.eq.s32.totalorder %v270, 1
    %vm273 = vmpackc.low %vm272, %vm271
    %v274 = vsel %vm273, 65537, 0
    %v275 = vlaneseq
    %v276 = vshrl.u32 %v275, 7
    %v277 = vsub.s32 0, %v276
    %v278 = vrot.slane %v274, %v277
    %v279 = vlaneseq
    %v280 = vshrl.u32 %v279, 7
    %v281 = vsub.s32 4, %v280
    %v282 = vrot.slane %v274, %v281
    %vm283 = vcmp.ne.s16.totalorder %v278, 0
    %vm284 = vcmp.ne.s16.totalorder %v282, 0
    %v285 = vsel %vm283, %v263, 0
    %v286 = vsel %vm284, %v267, 0
    %287 = vrot.lane.b32.xlu0 %v112, 126
    %v288 = vpop.permute.xlu0 %287
    %289 = vrot.lane.b32.xlu0 %v113, 126
    %v290 = vpop.permute.xlu0 %289
    %vm291 = vcmask 1031168
    %v292 = vsel %vm291, %v288, %v290
    %vm294 = vcmask 1031168
    %v296 = vsel %vm294, %v290, 0
    %v298 = vsel %vm100, 1, 0
    %v299 = vsel %vm101, 1, 0
    %vm300 = vcmp.eq.s32.totalorder %v298, 1
    %vm301 = vcmp.eq.s32.totalorder %v299, 1
    %vm302 = vmpackc.low %vm301, %vm300
    %v303 = vsel %vm302, 65537, 0
    %v304 = vlaneseq
    %v305 = vshrl.u32 %v304, 7
    %v306 = vsub.s32 0, %v305
    %v307 = vrot.slane %v303, %v306
    %v308 = vlaneseq
    %v309 = vshrl.u32 %v308, 7
    %v310 = vsub.s32 4, %v309
    %v311 = vrot.slane %v303, %v310
    %vm312 = vcmp.ne.s16.totalorder %v307, 0
    %vm313 = vcmp.ne.s16.totalorder %v311, 0
    %v314 = vsel %vm312, %v292, 0
    %v315 = vsel %vm313, %v296, 0
    %316 = vrot.lane.b32.xlu0 %v112, 125
    %v317 = vpop.permute.xlu0 %316
    %318 = vrot.lane.b32.xlu0 %v113, 125
    %v319 = vpop.permute.xlu0 %318
    %vm320 = vcmask 1022976
    %v321 = vsel %vm320, %v317, %v319
    %vm323 = vcmask 1022976
    %v325 = vsel %vm323, %v319, 0
    %v327 = vsel %vm108, 1, 0
    %v328 = vsel %vm109, 1, 0
    %vm329 = vcmp.eq.s32.totalorder %v327, 1
    %vm330 = vcmp.eq.s32.totalorder %v328, 1
    %vm331 = vmpackc.low %vm330, %vm329
    %v332 = vsel %vm331, 65537, 0
    %v333 = vlaneseq
    %v334 = vshrl.u32 %v333, 7
    %v335 = vsub.s32 0, %v334
    %v336 = vrot.slane %v332, %v335
    %v337 = vlaneseq
    %v338 = vshrl.u32 %v337, 7
    %v339 = vsub.s32 4, %v338
    %v340 = vrot.slane %v332, %v339
    %vm341 = vcmp.ne.s16.totalorder %v336, 0
    %vm342 = vcmp.ne.s16.totalorder %v340, 0
    %v343 = vsel %vm341, %v321, 0
    %v344 = vsel %vm342, %v325, 0
    %v346 = vrot.slane %v134, 4
    %v347 = vrot.slane %v131, 4
    %v348 = vrot.slane %v112, 4
    %v349 = vrot.slane %v113, 4
    %v351 = vrot.slane %v158, 4
    %v352 = vrot.slane %v161, 4
    %v355 = vrot.slane %v198, 4
    %v356 = vrot.slane %v199, 4
    %v359 = vrot.slane %v256, 4
    %v360 = vrot.slane %v257, 4
    %v363 = vrot.slane %v285, 4
    %v364 = vrot.slane %v286, 4
    %v367 = vrot.slane %v343, 4
    %v368 = vrot.slane %v344, 4
    %vm369 = vcmask 1043456
    %v371 = vsel %vm369, %v125, %v346
    %v375 = vsel %vm369, %v121, %v347
    %v378 = vsel %vm369, %v143, %v348
    %v382 = vsel %vm369, %v140, %v349
    %v386 = vsel %vm369, %v149, %v351
    %v389 = vsel %vm369, %v152, %v352
    %v393 = vsel %vm369, %v167, %v355
    %v396 = vsel %vm369, %v170, %v356
    %v400 = vsel %vm369, %v227, %v359
    %v404 = vsel %vm369, %v228, %v360
    %v408 = vsel %vm369, %v112, %v363
    %v412 = vsel %vm369, %v113, %v364
    %v416 = vsel %vm369, %v314, %v367
    %v420 = vsel %vm369, %v315, %v368
    %s422 = scalar_lea.vmem [#allocation2], 16
    %v423 = vld [vmem:[%s422] sm:$0xff]
    %v424 = vld [vmem:[%s422 + $0x8] sm:$0xff]
    %v425 = vpack.c.bf16 %v423, %v423
    %v426 = vpack.c.bf16 %v424, %v424
    %429 = vrot.lane.b32.xlu0 %v425, 48
    %v430 = vpop.permute.xlu0 %429
    %431 = vrot.lane.b32.xlu0 %v426, 48
    %v432 = vpop.permute.xlu0 %431
    %v433 = vsel %vm120, %v430, %v432
    %v435 = vsel %vm122, 0, %v430
    %436 = vrot.lane.b32.xlu0 %v425, 32
    %v437 = vpop.permute.xlu0 %436
    %438 = vrot.lane.b32.xlu0 %v426, 32
    %v439 = vpop.permute.xlu0 %438
    %v440 = vsel %vm130, %v437, %v439
    %v442 = vsel %vm132, 0, %v437
    %443 = vrot.lane.b32.xlu0 %v425, 16
    %v444 = vpop.permute.xlu0 %443
    %445 = vrot.lane.b32.xlu0 %v426, 16
    %v446 = vpop.permute.xlu0 %445
    %v447 = vsel %vm139, %v444, %v446
    %v449 = vsel %vm141, 0, %v444
    %450 = vrot.lane.b32.xlu0 %v425, 112
    %v451 = vpop.permute.xlu0 %450
    %452 = vrot.lane.b32.xlu0 %v426, 112
    %v453 = vpop.permute.xlu0 %452
    %v454 = vsel %vm148, %v451, %v453
    %v456 = vsel %vm150, %v453, 0
    %457 = vrot.lane.b32.xlu0 %v425, 96
    %v458 = vpop.permute.xlu0 %457
    %459 = vrot.lane.b32.xlu0 %v426, 96
    %v460 = vpop.permute.xlu0 %459
    %v461 = vsel %vm157, %v458, %v460
    %v463 = vsel %vm159, %v460, 0
    %464 = vrot.lane.b32.xlu0 %v425, 80
    %v465 = vpop.permute.xlu0 %464
    %466 = vrot.lane.b32.xlu0 %v426, 80
    %v467 = vpop.permute.xlu0 %466
    %v468 = vsel %vm166, %v465, %v467
    %v470 = vsel %vm168, %v467, 0
    %471 = vrot.lane.b32.xlu0 %v425, 3
    %v472 = vpop.permute.xlu0 %471
    %473 = vrot.lane.b32.xlu0 %v426, 3
    %v474 = vpop.permute.xlu0 %473
    %v475 = vsel %vm175, %v472, %v474
    %v478 = vsel %vm178, 0, %v472
    %v480 = vsel %vm196, %v478, 0
    %v481 = vsel %vm197, %v475, 0
    %482 = vrot.lane.b32.xlu0 %v425, 2
    %v483 = vpop.permute.xlu0 %482
    %484 = vrot.lane.b32.xlu0 %v426, 2
    %v485 = vpop.permute.xlu0 %484
    %v486 = vsel %vm204, %v483, %v485
    %v489 = vsel %vm207, 0, %v483
    %v491 = vsel %vm225, %v489, 0
    %v492 = vsel %vm226, %v486, 0
    %493 = vrot.lane.b32.xlu0 %v425, 1
    %v494 = vpop.permute.xlu0 %493
    %495 = vrot.lane.b32.xlu0 %v426, 1
    %v496 = vpop.permute.xlu0 %495
    %v497 = vsel %vm233, %v494, %v496
    %v500 = vsel %vm236, 0, %v494
    %v502 = vsel %vm254, %v500, 0
    %v503 = vsel %vm255, %v497, 0
    %504 = vrot.lane.b32.xlu0 %v425, 127
    %v505 = vpop.permute.xlu0 %504
    %506 = vrot.lane.b32.xlu0 %v426, 127
    %v507 = vpop.permute.xlu0 %506
    %v508 = vsel %vm262, %v505, %v507
    %v511 = vsel %vm265, %v507, 0
    %v513 = vsel %vm283, %v508, 0
    %v514 = vsel %vm284, %v511, 0
    %515 = vrot.lane.b32.xlu0 %v425, 126
    %v516 = vpop.permute.xlu0 %515
    %517 = vrot.lane.b32.xlu0 %v426, 126
    %v518 = vpop.permute.xlu0 %517
    %v519 = vsel %vm291, %v516, %v518
    %v522 = vsel %vm294, %v518, 0
    %v524 = vsel %vm312, %v519, 0
    %v525 = vsel %vm313, %v522, 0
    %526 = vrot.lane.b32.xlu0 %v425, 125
    %v527 = vpop.permute.xlu0 %526
    %528 = vrot.lane.b32.xlu0 %v426, 125
    %v529 = vpop.permute.xlu0 %528
    %v530 = vsel %vm320, %v527, %v529
    %v533 = vsel %vm323, %v529, 0
    %v535 = vsel %vm341, %v530, 0
    %v536 = vsel %vm342, %v533, 0
    %v538 = vrot.slane %v442, 4
    %v539 = vrot.slane %v440, 4
    %v540 = vrot.slane %v425, 4
    %v541 = vrot.slane %v426, 4
    %v543 = vrot.slane %v461, 4
    %v544 = vrot.slane %v463, 4
    %v547 = vrot.slane %v480, 4
    %v548 = vrot.slane %v481, 4
    %v551 = vrot.slane %v502, 4
    %v552 = vrot.slane %v503, 4
    %v555 = vrot.slane %v513, 4
    %v556 = vrot.slane %v514, 4
    %v559 = vrot.slane %v535, 4
    %v560 = vrot.slane %v536, 4
    %v562 = vsel %vm369, %v435, %v538
    %v566 = vsel %vm369, %v433, %v539
    %v569 = vsel %vm369, %v449, %v540
    %v573 = vsel %vm369, %v447, %v541
    %v577 = vsel %vm369, %v454, %v543
    %v580 = vsel %vm369, %v456, %v544
    %v584 = vsel %vm369, %v468, %v547
    %v587 = vsel %vm369, %v470, %v548
    %v591 = vsel %vm369, %v491, %v551
    %v595 = vsel %vm369, %v492, %v552
    %v599 = vsel %vm369, %v425, %v555
    %v603 = vsel %vm369, %v426, %v556
    %v607 = vsel %vm369, %v524, %v559
    %v611 = vsel %vm369, %v525, %v560
    %v613 = vld [vmem:[%s1] sm:$0xf]
    %v614 = vld [vmem:[%s1 + $0x4] sm:$0xf]
    %v617 = vunpack.c.l.b16 %v613
    %v618 = vunpack.c.l.b16 %v614
    %v619 = vpack.c.b16 %v618, %v617
    %v621 = vsel %vm150, %v619, 0
    %623 = vmatprep.subr.bf16.mxu0 %v375
    %624 = vmatpush1.bf16.msra.mxu0 %v371
    %625 = vmatprep.subr.bf16.mxu0 %v382
    %626 = vmatpush1.bf16.msra.mxu0 %v378
    %627 = vmatprep.subr.bf16.mxu0 %v389
    %628 = vmatpush1.bf16.msra.mxu0 %v386
    %629 = vmatprep.subr.bf16.mxu0 %v396
    %630 = vmatpush1.bf16.msra.mxu0 %v393
    %631 = vmatprep.subr.bf16.mxu0 %v404
    %632 = vmatpush1.bf16.msra.mxu0 %v400
    %633 = vmatprep.subr.bf16.mxu0 %v412
    %634 = vmatpush1.bf16.msra.mxu0 %v408
    %635 = vmatprep.subr.bf16.mxu0 %v420
    %636 = vmatpush1.bf16.msra.mxu0 %v416
    %637 = vmatprep.subr.bf16.mxu0 0
    %638 = vmatpush1.bf16.msra.mxu0 0
    %639 = vmatprep.subr.bf16.mxu0 0
    %640 = vmatpush1.bf16.msra.mxu0 0
    %641 = vmatprep.subr.bf16.mxu0 0
    %642 = vmatpush1.bf16.msra.mxu0 0
    %643 = vmatprep.subr.bf16.mxu0 0
    %644 = vmatpush1.bf16.msra.mxu0 0
    %645 = vmatprep.subr.bf16.mxu0 0
    %646 = vmatpush1.bf16.msra.mxu0 0
    %647 = vmatprep.subr.bf16.mxu0 0
    %648 = vmatpush1.bf16.msra.mxu0 0
    %649 = vmatprep.subr.bf16.mxu0 0
    %650 = vmatpush1.bf16.msra.mxu0 0
    %651 = vmatprep.subr.bf16.mxu0 0
    %652 = vmatpush1.bf16.msra.mxu0 0
    %653 = vmatprep.subr.bf16.mxu0 0
    %654 = vmatpush1.bf16.msra.mxu0 0
    %655 = vmatprep.mubr.bf16.mxu0 0
    %656 = vmatmul.mubr.bf16.gmra.mrb[0].mxu0 %v621
    %v657 = vpop.f32.mrb[0].mxu0
    %v658 = vadd.f32 0.0, %v657
    %v659 = vpop.f32.mrb[0].mxu0
    %v660 = vadd.f32 0.0, %v659
    %v661 = vpop.f32.mrb[0].mxu0
    %v662 = vadd.f32 0.0, %v661
    %v663 = vpop.f32.mrb[0].mxu0
    %v664 = vadd.f32 0.0, %v663
    %665 = vdwg.mxu0
    %666 = vmatprep.subr.bf16.mxu0 %v566
    %667 = vmatpush1.bf16.msra.mxu0 %v562
    %668 = vmatprep.subr.bf16.mxu0 %v573
    %669 = vmatpush1.bf16.msra.mxu0 %v569
    %670 = vmatprep.subr.bf16.mxu0 %v580
    %671 = vmatpush1.bf16.msra.mxu0 %v577
    %672 = vmatprep.subr.bf16.mxu0 %v587
    %673 = vmatpush1.bf16.msra.mxu0 %v584
    %674 = vmatprep.subr.bf16.mxu0 %v595
    %675 = vmatpush1.bf16.msra.mxu0 %v591
    %676 = vmatprep.subr.bf16.mxu0 %v603
    %677 = vmatpush1.bf16.msra.mxu0 %v599
    %678 = vmatprep.subr.bf16.mxu0 %v611
    %679 = vmatpush1.bf16.msra.mxu0 %v607
    %680 = vmatprep.subr.bf16.mxu0 0
    %681 = vmatpush1.bf16.msra.mxu0 0
    %682 = vmatprep.subr.bf16.mxu0 0
    %683 = vmatpush1.bf16.msra.mxu0 0
    %684 = vmatprep.subr.bf16.mxu0 0
    %685 = vmatpush1.bf16.msra.mxu0 0
    %686 = vmatprep.subr.bf16.mxu0 0
    %687 = vmatpush1.bf16.msra.mxu0 0
    %688 = vmatprep.subr.bf16.mxu0 0
    %689 = vmatpush1.bf16.msra.mxu0 0
    %690 = vmatprep.subr.bf16.mxu0 0
    %691 = vmatpush1.bf16.msra.mxu0 0
    %692 = vmatprep.subr.bf16.mxu0 0
    %693 = vmatpush1.bf16.msra.mxu0 0
    %694 = vmatprep.subr.bf16.mxu0 0
    %695 = vmatpush1.bf16.msra.mxu0 0
    %696 = vmatprep.subr.bf16.mxu0 0
    %697 = vmatpush1.bf16.msra.mxu0 0
    %698 = vmatprep.mubr.bf16.mxu0 0
    %699 = vmatmul.mubr.bf16.gmra.mrb[0].mxu0 %v621
    %v700 = vpop.f32.mrb[0].mxu0
    %v701 = vadd.f32 0.0, %v700
    %v702 = vpop.f32.mrb[0].mxu0
    %v703 = vadd.f32 0.0, %v702
    %v704 = vpop.f32.mrb[0].mxu0
    %v705 = vadd.f32 0.0, %v704
    %v706 = vpop.f32.mrb[0].mxu0
    %v707 = vadd.f32 0.0, %v706
    %708 = vdwg.mxu0
    %v709 = vld [vmem:[%s2] sm:$0xff]
    %711 = vset.pattern.permute.xlu0 0
    %712 = vperm.xlu0 %711, %v709
    %v713 = vpop.permute.xlu0 %712
    %v715 = vadd.f32 %v658, %v713
    %v716 = vadd.f32 %v660, %v713
    %v717 = vadd.f32 %v701, %v713
    %v718 = vadd.f32 %v703, %v713
    %v719 = vld [vmem:[%s3] sm:$0xff]
    %721 = vset.pattern.permute.xlu0 0
    %722 = vperm.xlu0 %721, %v719
    %v723 = vpop.permute.xlu0 %722
    %v725 = vadd.f32 %v662, %v723
    %v726 = vadd.f32 %v664, %v723
    %v727 = vadd.f32 %v705, %v723
    %v728 = vadd.f32 %v707, %v723
    %v729 = vmax.f32 %v715, %v725
    %v730 = vmax.f32 %v716, %v726
    %v731 = vmax.f32 %v717, %v727
    %v732 = vmax.f32 %v718, %v728
    %733 = vst [vmem:[#allocation5] sm:$0xff] %v729
    %734 = vst [vmem:[#allocation5 + $0x8] sm:$0xff] %v730
    %s735 = scalar_lea.vmem [#allocation5], 16
    %736 = vst [vmem:[%s735] sm:$0xff] %v731
    %737 = vst [vmem:[%s735 + $0x8] sm:$0xff] %v732
    // Predicated region
    $region22: #{tpu_custom_call.1} parent=1 // pred_check
      _
    $region23: #{tpu_custom_call.1} parent=1 // pred_check_branch
      %739 = sbr.rel (0) target = $region25
    $region24: #{tpu_custom_call.1} parent=1 // pred_region
      %s741 = ssub.s32 512, 512
      %742 = vsyncadd [#allocation4], %s741
      %s743 = sshll.u32 [#allocation5], 4
      %s744 = int_to_ptr.vmem [resolvable:$true] %s743
      %749 = dma.vmem_to_hbm [thread:$0]  %s744, 512, %s4, [#allocation4], 256, 256, 16
    $region25: #{tpu_custom_call.1} parent=1 // pred_fallthru
      _
    // Predicated region
    $region26: #{tpu_custom_call.1} parent=1 // pred_check
      _
    $region27: #{tpu_custom_call.1} parent=1 // pred_check_branch
      %751 = sbr.rel (0) target = $region29
    $region28: #{tpu_custom_call.1} parent=1 // pred_region
      %752 = dma.done [#allocation4], 512
    $region29: #{tpu_custom_call.1} parent=1 // pred_fallthru
      _
    %753 = vsyncpa [#allocation3], 1
    %754 = vsyncpa [#allocation4], 1

</llo_original>
